<compile_context>
chip_gen: v5e
topology: v5e:2x2
jax: 0.10.0
libtpu: 0.0.40
codegen_flags: <defaults>
</compile_context>

<pallas_src>
import functools

import jax
import jax.numpy as jnp
from jax.experimental import pallas as pl
from jax.experimental.pallas import tpu as pltpu


# --------------------------------------------------------------------------- #
# Kernel 1: embedding gather (HBM DMA) + attention + single-step multi-layer LSTM
# --------------------------------------------------------------------------- #
def _attn_lstm_kernel(num_layers,
                      tok_ref, emb_hbm_ref, h0_ref, c0_ref, enc_ref, encp_ref,
                      wah_ref, ba_ref, v_ref,
                      *rest):
    # rest = per-layer fused LSTM weights
    #   layer 0   : w_ie (E,4H), w_ic (H,4H), w_hh (H,4H), b (1,4H)
    #   layer >=1 : w_ih (H,4H), w_hh (H,4H), b (1,4H)
    # then outputs: x_top, h_out, c_out, attn ; then scratch: emb_scr, emb_sem.
    L = num_layers
    n_lstm = 4 + 3 * (L - 1)
    lstm_refs = rest[:n_lstm]
    xtop_ref, hout_ref, cout_ref, attn_ref = rest[n_lstm:n_lstm + 4]
    emb_scr, emb_sem = rest[n_lstm + 4:]

    B, T, H = enc_ref.shape
    f32 = jnp.float32

    # ---- Embedding gather: issue all row-DMAs from HBM at kernel entry ----
    emb_copies = []
    for b in range(B):
        cp = pltpu.make_async_copy(
            emb_hbm_ref.at[pl.ds(tok_ref[b], 1), :],   # (1, E) row from HBM table
            emb_scr.at[pl.ds(b, 1), :],                # (1, E) row of VMEM scratch
            emb_sem.at[b])
        cp.start()
        emb_copies.append(cp)

    # ---------------- Attention (hides the embedding DMA latency) ----------------
    enc = enc_ref[...]                                  # (B, T, H)
    h_top = h0_ref[L - 1]                               # hidden[0][-1] -> (B, H)
    # cat((hidden, enc), -1) @ Wa^T == hidden @ Wa_h + (enc @ Wa_e); the encoder
    # half (encp_ref) is precomputed once per sequence in the driver; bias folded
    # into the hidden projection.
    wah = wah_ref[...].astype(f32)                      # bf16 -> f32 dequant (VPU)
    e_h = jnp.dot(h_top, wah, preferred_element_type=f32) + ba_ref[...]
    energy = jnp.tanh(e_h[:, None, :] + encp_ref[...])  # (B, T, H)
    scores = jnp.sum(energy * v_ref[...][None, :, :], axis=2)                 # (B, T)

    scores = scores - jnp.max(scores, axis=1, keepdims=True)
    ex = jnp.exp(scores)
    denom = jnp.sum(ex, axis=1, keepdims=True)
    inv = pl.reciprocal(denom, approx=True)             # EUP slot (effectively free)
    inv = inv * (2.0 - denom * inv)                     # one Newton step -> ~f32
    attn = ex * inv                                     # (B, T)
    attn_ref[...] = attn

    # bmm(attn.unsqueeze(1), enc) on the MXU: (B,1,T) x (B,T,H) -> (B,1,H)
    context = jnp.einsum("bqt,bth->bqh", attn[:, None, :], enc,
                         preferred_element_type=f32)[:, 0, :]                 # (B, H)

    # ---- wait for the embedding gather right before its first use ----
    for cp in emb_copies:
        cp.wait()
    emb = emb_scr[...]                                  # (B, E)

    # ------------- single-step multi-layer LSTM (fused 4H gate matmuls) -------------
    x = None
    cur = 0
    for layer in range(L):
        h_prev = h0_ref[layer]                          # (B, H) read BEFORE write (aliased)
        c_prev = c0_ref[layer]                          # (B, H)
        if layer == 0:
            w_ie, w_ic, w_hh, bias = lstm_refs[cur:cur + 4]
            cur += 4
            gates = (jnp.dot(emb, w_ie[...].astype(f32), preferred_element_type=f32)
                     + jnp.dot(context, w_ic[...].astype(f32), preferred_element_type=f32))
        else:
            w_ih, w_hh, bias = lstm_refs[cur:cur + 3]
            cur += 3
            gates = jnp.dot(x, w_ih[...].astype(f32), preferred_element_type=f32)
        gates = (gates
                 + jnp.dot(h_prev, w_hh[...].astype(f32), preferred_element_type=f32)
                 + bias[...])                           # (B, 4H), gate order i,f,g,o
        i_g = jax.nn.sigmoid(gates[:, 0 * H:1 * H])
        f_g = jax.nn.sigmoid(gates[:, 1 * H:2 * H])
        g_g = jnp.tanh(gates[:, 2 * H:3 * H])
        o_g = jax.nn.sigmoid(gates[:, 3 * H:4 * H])
        c_new = f_g * c_prev + i_g * g_g
        h_new = o_g * jnp.tanh(c_new)
        hout_ref[layer] = h_new                         # aliased with h0 (in-place state)
        cout_ref[layer] = c_new                         # aliased with c0 (in-place state)
        x = h_new

    xtop_ref[...] = x                                   # (B, H) feeds vocab projection


# --------------------------------------------------------------------------- #
# Kernel 2: vocab projection, tiled over V (double-buffered w_out streaming)
# --------------------------------------------------------------------------- #
def _vocab_proj_kernel(x_ref, w_ref, b_ref, out_ref):
    out_ref[...] = (jnp.dot(x_ref[...], w_ref[...].astype(jnp.float32),
                            preferred_element_type=jnp.float32) + b_ref[...])


def _pick_tile_v(V):
    if V <= 2048:
        return V
    # bf16 (H,2048) tiles double-buffered stay well under v7x's 32 MiB scoped VMEM.
    for t in (2048, 1024, 512, 256, 128):
        if V % t == 0:
            return t
    return V


def _vocab_projection(x, w_out, b_out):
    B, H = x.shape
    V = w_out.shape[1]
    tv = _pick_tile_v(V)
    return pl.pallas_call(
        _vocab_proj_kernel,
        out_shape=jax.ShapeDtypeStruct((B, V), jnp.float32),
        grid=(V // tv,),
        in_specs=[pl.BlockSpec((B, H), lambda j: (0, 0)),     # resident across tiles
                  pl.BlockSpec((H, tv), lambda j: (0, j)),    # streamed, double-buffered
                  pl.BlockSpec((1, tv), lambda j: (0, j))],
        out_specs=pl.BlockSpec((B, tv), lambda j: (0, j)),
        compiler_params=pltpu.CompilerParams(
            dimension_semantics=("parallel",),                # v7x: split tiles across 2 TCs
            vmem_limit_bytes=32 * 1024 * 1024),
    )(x, w_out, b_out)


# --------------------------------------------------------------------------- #
# Driver
# --------------------------------------------------------------------------- #
def _flat_lstm_params(params, num_layers):
    flat = []
    for layer in range(num_layers):
        lp = params["lstm"][layer]
        if layer == 0:
            flat += [lp["w_ie"], lp["w_ic"], lp["w_hh"], lp["b"]]
        else:
            flat += [lp["w_ih"], lp["w_hh"], lp["b"]]
    return flat


def precompute_encoder_proj(params, encoder_outputs):
    """Encoder half of the attention linear; compute ONCE per sequence, reuse every step."""
    return jnp.einsum("bth,hk->btk", encoder_outputs,
                      params["wa_e"].astype(jnp.float32))


def output_decoder_forward(params, token, hidden, encoder_outputs, enc_proj=None):
    """Mirrors OutputDecoder.forward (LSTM, return_attention=True, mask=None)."""
    h0, c0 = hidden
    L, B, H = h0.shape
    _, T, _ = encoder_outputs.shape
    E = params["embedding"].shape[1]
    V = params["w_out"].shape[1]

    if enc_proj is None:   # per-sequence precompute; pass explicitly in an AR loop
        enc_proj = precompute_encoder_proj(params, encoder_outputs)

    in_arrays = ([token, params["embedding"], h0, c0, encoder_outputs, enc_proj,
                  params["wa_h"], params["b_attn"], params["v"]]
                 + _flat_lstm_params(params, L))

    vmem = pl.BlockSpec(memory_space=pltpu.MemorySpace.VMEM)
    smem = pl.BlockSpec(memory_space=pltpu.MemorySpace.SMEM)
    hbm = pl.BlockSpec(memory_space=pl.ANY)               # embedding stays in HBM

    x_top, h_out, c_out, attn_w = pl.pallas_call(
        functools.partial(_attn_lstm_kernel, L),
        out_shape=(
            jax.ShapeDtypeStruct((B, H), jnp.float32),    # top-layer hidden (to vocab proj)
            jax.ShapeDtypeStruct((L, B, H), jnp.float32),
            jax.ShapeDtypeStruct((L, B, H), jnp.float32),
            jax.ShapeDtypeStruct((B, T), jnp.float32),
        ),
        in_specs=[smem, hbm] + [vmem] * (len(in_arrays) - 2),
        out_specs=(vmem, vmem, vmem, vmem),
        scratch_shapes=[pltpu.VMEM((B, E), jnp.float32),      # gathered embeddings
                        pltpu.SemaphoreType.DMA((B,))],
        # h0 -> h_out, c0 -> c_out: in-place recurrent-state update.
        input_output_aliases={2: 1, 3: 2},
        compiler_params=pltpu.CompilerParams(vmem_limit_bytes=32 * 1024 * 1024),
    )(*in_arrays)

    logits = _vocab_projection(x_top, params["w_out"], params["b_out"])
    return logits, (h_out, c_out), attn_w


# --------------------------------------------------------------------------- #
# Params / reference
# --------------------------------------------------------------------------- #
def init_params(key, vocab_size, embedding_size, hidden_size, layers):
    H, E, V = hidden_size, embedding_size, vocab_size
    keys = iter(jax.random.split(key, 16 + 8 * layers))
    nrm = lambda shape: 0.1 * jax.random.normal(next(keys), shape, jnp.float32)
    bfw = lambda shape: nrm(shape).astype(jnp.bfloat16)   # matmul weights stored bf16
    p = {}
    p["embedding"] = nrm((V, E)).at[0].set(0.0)           # padding_idx=0 row zeroed
    # Attention nn.Linear(2H, H): transposed, pre-split into hidden / encoder halves.
    p["wa_h"] = bfw((H, H))
    p["wa_e"] = bfw((H, H))
    p["b_attn"] = nrm((1, H))
    p["v"] = jax.random.uniform(next(keys), (1, H), jnp.float32)
    # LSTM weights: transposed, gates fused along the 4H axis (order i,f,g,o);
    # layer-0 input weight split into embedded / context halves; b = b_ih + b_hh.
    p["lstm"] = []
    for layer in range(layers):
        lp = {}
        if layer == 0:
            lp["w_ie"] = bfw((E, 4 * H))
            lp["w_ic"] = bfw((H, 4 * H))
        else:
            lp["w_ih"] = bfw((H, 4 * H))
        lp["w_hh"] = bfw((H, 4 * H))
        lp["b"] = nrm((1, 4 * H))
        p["lstm"].append(lp)
    p["w_out"] = bfw((H, V))
    p["b_out"] = nrm((1, V))
    return p


def _reference_forward(params, token, hidden, encoder_outputs):
    """Pure-JAX reference of OutputDecoder.forward (eval mode, mask=None)."""
    f32 = lambda w: w.astype(jnp.float32)
    h0, c0 = hidden
    L, B, H = h0.shape
    T = encoder_outputs.shape[1]
    emb = jnp.take(params["embedding"], token, axis=0)
    w_attn = jnp.concatenate([f32(params["wa_h"]), f32(params["wa_e"])], axis=0)   # (2H, H)
    h_top = h0[-1]
    cat = jnp.concatenate(
        [jnp.broadcast_to(h_top[:, None, :], (B, T, H)), encoder_outputs], axis=2)
    energy = jnp.tanh(cat @ w_attn + params["b_attn"][None])
    scores = jnp.sum(energy * params["v"][None], axis=2)
    attn = jax.nn.softmax(scores, axis=1)
    context = jnp.einsum("bt,bth->bh", attn, encoder_outputs)
    x = jnp.concatenate([emb, context], axis=1)
    h_all, c_all = [], []
    for layer in range(L):
        lp = params["lstm"][layer]
        if layer == 0:
            w_ih = jnp.concatenate([f32(lp["w_ie"]), f32(lp["w_ic"])], axis=0)
        else:
            w_ih = f32(lp["w_ih"])
        gates = x @ w_ih + h0[layer] @ f32(lp["w_hh"]) + lp["b"]
        i_g = jax.nn.sigmoid(gates[:, 0 * H:1 * H])
        f_g = jax.nn.sigmoid(gates[:, 1 * H:2 * H])
        g_g = jnp.tanh(gates[:, 2 * H:3 * H])
        o_g = jax.nn.sigmoid(gates[:, 3 * H:4 * H])
        c_n = f_g * c0[layer] + i_g * g_g
        h_n = o_g * jnp.tanh(c_n)
        h_all.append(h_n); c_all.append(c_n)
        x = h_n
    logits = x @ f32(params["w_out"]) + params["b_out"]
    return logits, (jnp.stack(h_all), jnp.stack(c_all)), attn


if __name__ == "__main__":
    vocab_size, embedding_size, hidden_size, layers = 24, 32, 32, 2
    B, T = 2, 8

    key = jax.random.PRNGKey(0)
    k_p, k_tok, k_h, k_c, k_enc = jax.random.split(key, 5)
    params = init_params(k_p, vocab_size, embedding_size, hidden_size, layers)

    token = jax.random.randint(k_tok, (B,), 1, vocab_size, dtype=jnp.int32)
    h0 = 0.5 * jax.random.normal(k_h, (layers, B, hidden_size), jnp.float32)
    c0 = 0.5 * jax.random.normal(k_c, (layers, B, hidden_size), jnp.float32)
    encoder_outputs = 0.5 * jax.random.normal(k_enc, (B, T, hidden_size), jnp.float32)

    # Reference first (independent of the aliased pallas_call).
    ref_logits, (ref_h, ref_c), ref_attn = _reference_forward(
        params, token, (h0, c0), encoder_outputs)

    # Encoder-side attention projection: computed once per sequence, reused per step.
    enc_proj = precompute_encoder_proj(params, encoder_outputs)

    fwd = jax.jit(output_decoder_forward)
    logits, (h_out, c_out), attn_w = fwd(params, token, (h0, c0), encoder_outputs, enc_proj)
    jax.block_until_ready((logits, h_out, c_out, attn_w))

    assert jnp.allclose(logits, ref_logits, atol=1e-3, rtol=1e-3)
    assert jnp.allclose(h_out, ref_h, atol=1e-3, rtol=1e-3)
    assert jnp.allclose(c_out, ref_c, atol=1e-3, rtol=1e-3)
    assert jnp.allclose(attn_w, ref_attn, atol=1e-3, rtol=1e-3)

    print("KERNEL_OK")
</pallas_src>

<mosaic_0001>
module attributes {stable_mosaic.version = 11 : i64} {
  func.func @_vocab_proj_kernel(%arg0: i32, %arg1: memref<2x32xf32, #tpu.memory_space<vmem>>, %arg2: memref<32x24xbf16, #tpu.memory_space<vmem>>, %arg3: memref<1x24xf32, #tpu.memory_space<vmem>>, %arg4: memref<2x24xf32, #tpu.memory_space<vmem>>) attributes {dimension_semantics = [#tpu.dimension_semantics<parallel>], iteration_bounds = array<i64: 1>, scalar_prefetch = 0 : i64, scratch_operands = 0 : i64, tpu.core_type = #tpu.core_type<tc>, window_params = [{pipeline_mode = #tpu.pipeline_mode<synchronous>, transform_indices = @transform_0, window_bounds = array<i64: 2, 32>}, {transform_indices = @transform_1, window_bounds = array<i64: 32, 24>}, {transform_indices = @transform_2, window_bounds = array<i64: 1, 24>}, {transform_indices = @transform_3, window_bounds = array<i64: 2, 24>}]} {
    %c0 = arith.constant 0 : index
    %c0_0 = arith.constant 0 : index
    %0 = vector.load %arg1[%c0, %c0_0] : memref<2x32xf32, #tpu.memory_space<vmem>>, vector<2x32xf32>
    %c0_1 = arith.constant 0 : index
    %c0_2 = arith.constant 0 : index
    %1 = vector.load %arg2[%c0_1, %c0_2] : memref<32x24xbf16, #tpu.memory_space<vmem>>, vector<32x24xbf16>
    %2 = arith.extf %1 : vector<32x24xbf16> to vector<32x24xf32>
    %cst = arith.constant dense<0.000000e+00> : vector<2x24xf32>
    %3 = tpu.matmul %0, %2, %cst {dimension_numbers = #tpu.dot_dimension_numbers<[1], [0], [0], [1], [0, 0, 1, 1], [], []>} : vector<2x32xf32>, vector<32x24xf32>, vector<2x24xf32> -> vector<2x24xf32>
    %c0_3 = arith.constant 0 : index
    %c0_4 = arith.constant 0 : index
    %4 = vector.load %arg3[%c0_3, %c0_4] : memref<1x24xf32, #tpu.memory_space<vmem>>, vector<1x24xf32>
    %5 = vector.broadcast %4 : vector<1x24xf32> to vector<2x24xf32>
    %6 = arith.addf %3, %5 : vector<2x24xf32>
    %c0_5 = arith.constant 0 : index
    %c0_6 = arith.constant 0 : index
    %7 = vector.load %arg4[%c0_5, %c0_6] : memref<2x24xf32, #tpu.memory_space<vmem>>, vector<2x24xf32>
    tpu.vector_store %arg4[%c0_5, %c0_6], %6 {strides = array<i32>} : memref<2x24xf32, #tpu.memory_space<vmem>>, vector<2x24xf32>,
    return
  }
  func.func @transform_0(%arg0: i32) -> (i32, i32) {
    %c0_i32 = arith.constant 0 : i32
    %c0_i32_0 = arith.constant 0 : i32
    %c0_i32_1 = arith.constant 0 : i32
    return %c0_i32, %c0_i32_0 : i32, i32
  }
  func.func @transform_1(%arg0: i32) -> (i32, i32) {
    %c0_i32 = arith.constant 0 : i32
    %c0_i32_0 = arith.constant 0 : i32
    return %c0_i32, %arg0 : i32, i32
  }
  func.func @transform_2(%arg0: i32) -> (i32, i32) {
    %c0_i32 = arith.constant 0 : i32
    %c0_i32_0 = arith.constant 0 : i32
    return %c0_i32, %arg0 : i32, i32
  }
  func.func @transform_3(%arg0: i32) -> (i32, i32) {
    %c0_i32 = arith.constant 0 : i32
    %c0_i32_0 = arith.constant 0 : i32
    return %c0_i32, %arg0 : i32, i32
  }
}

module attributes {stable_mosaic.version = 11 : i64} {
  func.func @_attn_lstm_kernel(%arg0: memref<2xi32, #tpu.memory_space<smem>>, %arg1: memref<24x32xf32, #tpu.memory_space<any>>, %arg2: memref<2x2x32xf32, #tpu.memory_space<vmem>>, %arg3: memref<2x2x32xf32, #tpu.memory_space<vmem>>, %arg4: memref<2x8x32xf32, #tpu.memory_space<vmem>>, %arg5: memref<2x8x32xf32, #tpu.memory_space<vmem>>, %arg6: memref<32x32xbf16, #tpu.memory_space<vmem>>, %arg7: memref<1x32xf32, #tpu.memory_space<vmem>>, %arg8: memref<1x32xf32, #tpu.memory_space<vmem>>, %arg9: memref<32x128xbf16, #tpu.memory_space<vmem>>, %arg10: memref<32x128xbf16, #tpu.memory_space<vmem>>, %arg11: memref<32x128xbf16, #tpu.memory_space<vmem>>, %arg12: memref<1x128xf32, #tpu.memory_space<vmem>>, %arg13: memref<32x128xbf16, #tpu.memory_space<vmem>>, %arg14: memref<32x128xbf16, #tpu.memory_space<vmem>>, %arg15: memref<1x128xf32, #tpu.memory_space<vmem>>, %arg16: memref<2x32xf32, #tpu.memory_space<vmem>>, %arg17: memref<2x2x32xf32, #tpu.memory_space<vmem>>, %arg18: memref<2x2x32xf32, #tpu.memory_space<vmem>>, %arg19: memref<2x8xf32, #tpu.memory_space<vmem>>, %arg20: memref<2x32xf32, #tpu.memory_space<vmem>>, %arg21: memref<2x!tpu.dma_semaphore, #tpu.memory_space<semaphore_mem>>) attributes {dimension_semantics = [], scalar_prefetch = 0 : i64, scratch_operands = 2 : i64, tpu.core_type = #tpu.core_type<tc>} {
    %c0 = arith.constant 0 : index
    %0 = memref.load %arg0[%c0] : memref<2xi32, #tpu.memory_space<smem>>
    %c0_i32 = arith.constant 0 : i32
    %c0_i32_0 = arith.constant 0 : i32
    %1 = tpu.memref_slice %arg1[%0, %c0_i32_0] : memref<24x32xf32, #tpu.memory_space<any>> -> memref<1x32xf32, #tpu.memory_space<any>>
    %c0_i32_1 = arith.constant 0 : i32
    %c0_i32_2 = arith.constant 0 : i32
    %2 = tpu.memref_slice %arg20[%c0_i32_1, %c0_i32_2] : memref<2x32xf32, #tpu.memory_space<vmem>> -> memref<1x32xf32, #tpu.memory_space<vmem>>
    %3 = tpu.memref_slice %arg21[%c0_i32] : memref<2x!tpu.dma_semaphore, #tpu.memory_space<semaphore_mem>> -> memref<1x!tpu.dma_semaphore, #tpu.memory_space<semaphore_mem>>
    %4 = tpu.memref_squeeze %3 : memref<1x!tpu.dma_semaphore, #tpu.memory_space<semaphore_mem>> -> memref<!tpu.dma_semaphore, #tpu.memory_space<semaphore_mem>>
    tpu.enqueue_dma source(%1 : memref<1x32xf32, #tpu.memory_space<any>>) target(%2 : memref<1x32xf32, #tpu.memory_space<vmem>>) target_semaphore(%4 : memref<!tpu.dma_semaphore, #tpu.memory_space<semaphore_mem>>)
    %c1 = arith.constant 1 : index
    %5 = memref.load %arg0[%c1] : memref<2xi32, #tpu.memory_space<smem>>
    %c1_i32 = arith.constant 1 : i32
    %c0_i32_3 = arith.constant 0 : i32
    %6 = tpu.memref_slice %arg1[%5, %c0_i32_3] : memref<24x32xf32, #tpu.memory_space<any>> -> memref<1x32xf32, #tpu.memory_space<any>>
    %c1_i32_4 = arith.constant 1 : i32
    %c0_i32_5 = arith.constant 0 : i32
    %7 = tpu.memref_slice %arg20[%c1_i32_4, %c0_i32_5] : memref<2x32xf32, #tpu.memory_space<vmem>> -> memref<1x32xf32, #tpu.memory_space<vmem>>
    %8 = tpu.memref_slice %arg21[%c1_i32] : memref<2x!tpu.dma_semaphore, #tpu.memory_space<semaphore_mem>> -> memref<1x!tpu.dma_semaphore, #tpu.memory_space<semaphore_mem>>
    %9 = tpu.memref_squeeze %8 : memref<1x!tpu.dma_semaphore, #tpu.memory_space<semaphore_mem>> -> memref<!tpu.dma_semaphore, #tpu.memory_space<semaphore_mem>>
    tpu.enqueue_dma source(%6 : memref<1x32xf32, #tpu.memory_space<any>>) target(%7 : memref<1x32xf32, #tpu.memory_space<vmem>>) target_semaphore(%9 : memref<!tpu.dma_semaphore, #tpu.memory_space<semaphore_mem>>)
    %c0_6 = arith.constant 0 : index
    %c0_7 = arith.constant 0 : index
    %c0_8 = arith.constant 0 : index
    %10 = vector.load %arg4[%c0_6, %c0_7, %c0_8] : memref<2x8x32xf32, #tpu.memory_space<vmem>>, vector<2x8x32xf32>
    %c1_9 = arith.constant 1 : index
    %c0_10 = arith.constant 0 : index
    %c0_11 = arith.constant 0 : index
    %11 = vector.load %arg2[%c1_9, %c0_10, %c0_11] : memref<2x2x32xf32, #tpu.memory_space<vmem>>, vector<1x2x32xf32>
    %12 = vector.shape_cast %11 : vector<1x2x32xf32> to vector<2x32xf32>
    %c0_12 = arith.constant 0 : index
    %c0_13 = arith.constant 0 : index
    %13 = vector.load %arg6[%c0_12, %c0_13] : memref<32x32xbf16, #tpu.memory_space<vmem>>, vector<32x32xbf16>
    %14 = arith.extf %13 : vector<32x32xbf16> to vector<32x32xf32>
    %cst = arith.constant dense<0.000000e+00> : vector<2x32xf32>
    %15 = tpu.matmul %12, %14, %cst {dimension_numbers = #tpu.dot_dimension_numbers<[1], [0], [0], [1], [0, 0, 1, 1], [], []>} : vector<2x32xf32>, vector<32x32xf32>, vector<2x32xf32> -> vector<2x32xf32>
    %c0_14 = arith.constant 0 : index
    %c0_15 = arith.constant 0 : index
    %16 = vector.load %arg7[%c0_14, %c0_15] : memref<1x32xf32, #tpu.memory_space<vmem>>, vector<1x32xf32>
    %17 = vector.broadcast %16 : vector<1x32xf32> to vector<2x32xf32>
    %18 = arith.addf %15, %17 : vector<2x32xf32>
    %19 = vector.shape_cast %18 : vector<2x32xf32> to vector<2x1x32xf32>
    %c0_16 = arith.constant 0 : index
    %c0_17 = arith.constant 0 : index
    %c0_18 = arith.constant 0 : index
    %20 = vector.load %arg5[%c0_16, %c0_17, %c0_18] : memref<2x8x32xf32, #tpu.memory_space<vmem>>, vector<2x8x32xf32>
    %21 = vector.broadcast %19 : vector<2x1x32xf32> to vector<2x8x32xf32>
    %22 = arith.addf %21, %20 : vector<2x8x32xf32>
    %23 = math.tanh %22 : vector<2x8x32xf32>
    %c0_19 = arith.constant 0 : index
    %c0_20 = arith.constant 0 : index
    %24 = vector.load %arg8[%c0_19, %c0_20] : memref<1x32xf32, #tpu.memory_space<vmem>>, vector<1x32xf32>
    %25 = vector.shape_cast %24 : vector<1x32xf32> to vector<1x1x32xf32>
    %26 = vector.broadcast %25 : vector<1x1x32xf32> to vector<2x8x32xf32>
    %27 = arith.mulf %23, %26 : vector<2x8x32xf32>
    %cst_21 = arith.constant dense<0.000000e+00> : vector<2x8xf32>
    %28 = vector.multi_reduction <add>, %27, %cst_21 [2] : vector<2x8x32xf32> to vector<2x8xf32>
    %cst_22 = arith.constant dense<0xFF800000> : vector<2xf32>
    %29 = vector.multi_reduction <maximumf>, %28, %cst_22 [1] : vector<2x8xf32> to vector<2xf32>
    %30 = vector.shape_cast %29 : vector<2xf32> to vector<2x1xf32>
    %31 = vector.broadcast %30 : vector<2x1xf32> to vector<2x8xf32>
    %32 = arith.subf %28, %31 : vector<2x8xf32>
    %33 = math.exp %32 : vector<2x8xf32>
    %cst_23 = arith.constant dense<0.000000e+00> : vector<2xf32>
    %34 = vector.multi_reduction <add>, %33, %cst_23 [1] : vector<2x8xf32> to vector<2xf32>
    %35 = vector.shape_cast %34 : vector<2xf32> to vector<2x1xf32>
    %36 = tpu.reciprocal %35 {approx = true} : vector<2x1xf32> -> vector<2x1xf32>
    %37 = arith.mulf %35, %36 : vector<2x1xf32>
    %cst_24 = arith.constant 2.000000e+00 : f32
    %38 = vector.broadcast %cst_24 : f32 to vector<2x1xf32>
    %39 = arith.subf %38, %37 : vector<2x1xf32>
    %40 = arith.mulf %36, %39 : vector<2x1xf32>
    %41 = vector.broadcast %40 : vector<2x1xf32> to vector<2x8xf32>
    %42 = arith.mulf %33, %41 : vector<2x8xf32>
    %c0_25 = arith.constant 0 : index
    %c0_26 = arith.constant 0 : index
    %43 = vector.load %arg19[%c0_25, %c0_26] : memref<2x8xf32, #tpu.memory_space<vmem>>, vector<2x8xf32>
    tpu.vector_store %arg19[%c0_25, %c0_26], %42 {strides = array<i32>} : memref<2x8xf32, #tpu.memory_space<vmem>>, vector<2x8xf32>,
    %44 = vector.shape_cast %42 : vector<2x8xf32> to vector<2x1x8xf32>
    "tpu.trace_start"() <{level = 10 : i32, message = "bqt,bth->bqh"}> : () -> ()
    %cst_27 = arith.constant dense<0.000000e+00> : vector<2x1x32xf32>
    %45 = tpu.matmul %44, %10, %cst_27 {dimension_numbers = #tpu.dot_dimension_numbers<[2], [1], [1], [2], [0, 0, 0, 1, 1, 2], [0], [0]>} : vector<2x1x8xf32>, vector<2x8x32xf32>, vector<2x1x32xf32> -> vector<2x1x32xf32>
    "tpu.trace_stop"() : () -> ()
    %46 = vector.shape_cast %45 : vector<2x1x32xf32> to vector<2x32xf32>
    %c0_i32_28 = arith.constant 0 : i32
    %c0_i32_29 = arith.constant 0 : i32
    %47 = tpu.memref_slice %arg1[%0, %c0_i32_29] : memref<24x32xf32, #tpu.memory_space<any>> -> memref<1x32xf32, #tpu.memory_space<any>>
    %c0_i32_30 = arith.constant 0 : i32
    %c0_i32_31 = arith.constant 0 : i32
    %48 = tpu.memref_slice %arg20[%c0_i32_30, %c0_i32_31] : memref<2x32xf32, #tpu.memory_space<vmem>> -> memref<1x32xf32, #tpu.memory_space<vmem>>
    %49 = tpu.memref_slice %arg21[%c0_i32_28] : memref<2x!tpu.dma_semaphore, #tpu.memory_space<semaphore_mem>> -> memref<1x!tpu.dma_semaphore, #tpu.memory_space<semaphore_mem>>
    %50 = tpu.memref_squeeze %49 : memref<1x!tpu.dma_semaphore, #tpu.memory_space<semaphore_mem>> -> memref<!tpu.dma_semaphore, #tpu.memory_space<semaphore_mem>>
    tpu.wait_dma2 semaphore(%50 : memref<!tpu.dma_semaphore, #tpu.memory_space<semaphore_mem>>) src(%47 : memref<1x32xf32, #tpu.memory_space<any>>) dst(%48 : memref<1x32xf32, #tpu.memory_space<vmem>>)
    %c1_i32_32 = arith.constant 1 : i32
    %c0_i32_33 = arith.constant 0 : i32
    %51 = tpu.memref_slice %arg1[%5, %c0_i32_33] : memref<24x32xf32, #tpu.memory_space<any>> -> memref<1x32xf32, #tpu.memory_space<any>>
    %c1_i32_34 = arith.constant 1 : i32
    %c0_i32_35 = arith.constant 0 : i32
    %52 = tpu.memref_slice %arg20[%c1_i32_34, %c0_i32_35] : memref<2x32xf32, #tpu.memory_space<vmem>> -> memref<1x32xf32, #tpu.memory_space<vmem>>
    %53 = tpu.memref_slice %arg21[%c1_i32_32] : memref<2x!tpu.dma_semaphore, #tpu.memory_space<semaphore_mem>> -> memref<1x!tpu.dma_semaphore, #tpu.memory_space<semaphore_mem>>
    %54 = tpu.memref_squeeze %53 : memref<1x!tpu.dma_semaphore, #tpu.memory_space<semaphore_mem>> -> memref<!tpu.dma_semaphore, #tpu.memory_space<semaphore_mem>>
    tpu.wait_dma2 semaphore(%54 : memref<!tpu.dma_semaphore, #tpu.memory_space<semaphore_mem>>) src(%51 : memref<1x32xf32, #tpu.memory_space<any>>) dst(%52 : memref<1x32xf32, #tpu.memory_space<vmem>>)
    %c0_36 = arith.constant 0 : index
    %c0_37 = arith.constant 0 : index
    %55 = vector.load %arg20[%c0_36, %c0_37] : memref<2x32xf32, #tpu.memory_space<vmem>>, vector<2x32xf32>
    %c0_38 = arith.constant 0 : index
    %c0_39 = arith.constant 0 : index
    %c0_40 = arith.constant 0 : index
    %56 = vector.load %arg2[%c0_38, %c0_39, %c0_40] : memref<2x2x32xf32, #tpu.memory_space<vmem>>, vector<1x2x32xf32>
    %57 = vector.shape_cast %56 : vector<1x2x32xf32> to vector<2x32xf32>
    %c0_41 = arith.constant 0 : index
    %c0_42 = arith.constant 0 : index
    %c0_43 = arith.constant 0 : index
    %58 = vector.load %arg3[%c0_41, %c0_42, %c0_43] : memref<2x2x32xf32, #tpu.memory_space<vmem>>, vector<1x2x32xf32>
    %59 = vector.shape_cast %58 : vector<1x2x32xf32> to vector<2x32xf32>
    %c0_44 = arith.constant 0 : index
    %c0_45 = arith.constant 0 : index
    %60 = vector.load %arg9[%c0_44, %c0_45] : memref<32x128xbf16, #tpu.memory_space<vmem>>, vector<32x128xbf16>
    %61 = arith.extf %60 : vector<32x128xbf16> to vector<32x128xf32>
    %cst_46 = arith.constant dense<0.000000e+00> : vector<2x128xf32>
    %62 = tpu.matmul %55, %61, %cst_46 {dimension_numbers = #tpu.dot_dimension_numbers<[1], [0], [0], [1], [0, 0, 1, 1], [], []>} : vector<2x32xf32>, vector<32x128xf32>, vector<2x128xf32> -> vector<2x128xf32>
    %c0_47 = arith.constant 0 : index
    %c0_48 = arith.constant 0 : index
    %63 = vector.load %arg10[%c0_47, %c0_48] : memref<32x128xbf16, #tpu.memory_space<vmem>>, vector<32x128xbf16>
    %64 = arith.extf %63 : vector<32x128xbf16> to vector<32x128xf32>
    %cst_49 = arith.constant dense<0.000000e+00> : vector<2x128xf32>
    %65 = tpu.matmul %46, %64, %cst_49 {dimension_numbers = #tpu.dot_dimension_numbers<[1], [0], [0], [1], [0, 0, 1, 1], [], []>} : vector<2x32xf32>, vector<32x128xf32>, vector<2x128xf32> -> vector<2x128xf32>
    %66 = arith.addf %62, %65 : vector<2x128xf32>
    %c0_50 = arith.constant 0 : index
    %c0_51 = arith.constant 0 : index
    %67 = vector.load %arg11[%c0_50, %c0_51] : memref<32x128xbf16, #tpu.memory_space<vmem>>, vector<32x128xbf16>
    %68 = arith.extf %67 : vector<32x128xbf16> to vector<32x128xf32>
    %cst_52 = arith.constant dense<0.000000e+00> : vector<2x128xf32>
    %69 = tpu.matmul %57, %68, %cst_52 {dimension_numbers = #tpu.dot_dimension_numbers<[1], [0], [0], [1], [0, 0, 1, 1], [], []>} : vector<2x32xf32>, vector<32x128xf32>, vector<2x128xf32> -> vector<2x128xf32>
    %70 = arith.addf %66, %69 : vector<2x128xf32>
    %c0_53 = arith.constant 0 : index
    %c0_54 = arith.constant 0 : index
    %71 = vector.load %arg12[%c0_53, %c0_54] : memref<1x128xf32, #tpu.memory_space<vmem>>, vector<1x128xf32>
    %72 = vector.broadcast %71 : vector<1x128xf32> to vector<2x128xf32>
    %73 = arith.addf %70, %72 : vector<2x128xf32>
    %74 = vector.extract_strided_slice %73 {offsets = [0, 0], sizes = [2, 32], strides = [1, 1]} : vector<2x128xf32> to vector<2x32xf32>
    %75 = arith.negf %74 : vector<2x32xf32>
    %76 = math.exp %75 : vector<2x32xf32>
    %cst_55 = arith.constant 1.000000e+00 : f32
    %77 = vector.broadcast %cst_55 : f32 to vector<2x32xf32>
    %78 = arith.addf %77, %76 : vector<2x32xf32>
    %79 = arith.divf %77, %78 : vector<2x32xf32>
    %80 = vector.extract_strided_slice %73 {offsets = [0, 32], sizes = [2, 32], strides = [1, 1]} : vector<2x128xf32> to vector<2x32xf32>
    %81 = arith.negf %80 : vector<2x32xf32>
    %82 = math.exp %81 : vector<2x32xf32>
    %cst_56 = arith.constant 1.000000e+00 : f32
    %83 = vector.broadcast %cst_56 : f32 to vector<2x32xf32>
    %84 = arith.addf %83, %82 : vector<2x32xf32>
    %85 = arith.divf %83, %84 : vector<2x32xf32>
    %86 = vector.extract_strided_slice %73 {offsets = [0, 64], sizes = [2, 32], strides = [1, 1]} : vector<2x128xf32> to vector<2x32xf32>
    %87 = math.tanh %86 : vector<2x32xf32>
    %88 = vector.extract_strided_slice %73 {offsets = [0, 96], sizes = [2, 32], strides = [1, 1]} : vector<2x128xf32> to vector<2x32xf32>
    %89 = arith.negf %88 : vector<2x32xf32>
    %90 = math.exp %89 : vector<2x32xf32>
    %cst_57 = arith.constant 1.000000e+00 : f32
    %91 = vector.broadcast %cst_57 : f32 to vector<2x32xf32>
    %92 = arith.addf %91, %90 : vector<2x32xf32>
    %93 = arith.divf %91, %92 : vector<2x32xf32>
    %94 = arith.mulf %85, %59 : vector<2x32xf32>
    %95 = arith.mulf %79, %87 : vector<2x32xf32>
    %96 = arith.addf %94, %95 : vector<2x32xf32>
    %97 = math.tanh %96 : vector<2x32xf32>
    %98 = arith.mulf %93, %97 : vector<2x32xf32>
    %c0_58 = arith.constant 0 : index
    %c0_59 = arith.constant 0 : index
    %c0_60 = arith.constant 0 : index
    %99 = vector.load %arg17[%c0_58, %c0_59, %c0_60] : memref<2x2x32xf32, #tpu.memory_space<vmem>>, vector<1x2x32xf32>
    %100 = vector.shape_cast %99 : vector<1x2x32xf32> to vector<2x32xf32>
    %101 = vector.shape_cast %98 : vector<2x32xf32> to vector<1x2x32xf32>
    tpu.vector_store %arg17[%c0_58, %c0_59, %c0_60], %101 {strides = array<i32>} : memref<2x2x32xf32, #tpu.memory_space<vmem>>, vector<1x2x32xf32>,
    %c0_61 = arith.constant 0 : index
    %c0_62 = arith.constant 0 : index
    %c0_63 = arith.constant 0 : index
    %102 = vector.load %arg18[%c0_61, %c0_62, %c0_63] : memref<2x2x32xf32, #tpu.memory_space<vmem>>, vector<1x2x32xf32>
    %103 = vector.shape_cast %102 : vector<1x2x32xf32> to vector<2x32xf32>
    %104 = vector.shape_cast %96 : vector<2x32xf32> to vector<1x2x32xf32>
    tpu.vector_store %arg18[%c0_61, %c0_62, %c0_63], %104 {strides = array<i32>} : memref<2x2x32xf32, #tpu.memory_space<vmem>>, vector<1x2x32xf32>,
    %c1_64 = arith.constant 1 : index
    %c0_65 = arith.constant 0 : index
    %c0_66 = arith.constant 0 : index
    %105 = vector.load %arg2[%c1_64, %c0_65, %c0_66] : memref<2x2x32xf32, #tpu.memory_space<vmem>>, vector<1x2x32xf32>
    %106 = vector.shape_cast %105 : vector<1x2x32xf32> to vector<2x32xf32>
    %c1_67 = arith.constant 1 : index
    %c0_68 = arith.constant 0 : index
    %c0_69 = arith.constant 0 : index
    %107 = vector.load %arg3[%c1_67, %c0_68, %c0_69] : memref<2x2x32xf32, #tpu.memory_space<vmem>>, vector<1x2x32xf32>
    %108 = vector.shape_cast %107 : vector<1x2x32xf32> to vector<2x32xf32>
    %c0_70 = arith.constant 0 : index
    %c0_71 = arith.constant 0 : index
    %109 = vector.load %arg13[%c0_70, %c0_71] : memref<32x128xbf16, #tpu.memory_space<vmem>>, vector<32x128xbf16>
    %110 = arith.extf %109 : vector<32x128xbf16> to vector<32x128xf32>
    %cst_72 = arith.constant dense<0.000000e+00> : vector<2x128xf32>
    %111 = tpu.matmul %98, %110, %cst_72 {dimension_numbers = #tpu.dot_dimension_numbers<[1], [0], [0], [1], [0, 0, 1, 1], [], []>} : vector<2x32xf32>, vector<32x128xf32>, vector<2x128xf32> -> vector<2x128xf32>
    %c0_73 = arith.constant 0 : index
    %c0_74 = arith.constant 0 : index
    %112 = vector.load %arg14[%c0_73, %c0_74] : memref<32x128xbf16, #tpu.memory_space<vmem>>, vector<32x128xbf16>
    %113 = arith.extf %112 : vector<32x128xbf16> to vector<32x128xf32>
    %cst_75 = arith.constant dense<0.000000e+00> : vector<2x128xf32>
    %114 = tpu.matmul %106, %113, %cst_75 {dimension_numbers = #tpu.dot_dimension_numbers<[1], [0], [0], [1], [0, 0, 1, 1], [], []>} : vector<2x32xf32>, vector<32x128xf32>, vector<2x128xf32> -> vector<2x128xf32>
    %115 = arith.addf %111, %114 : vector<2x128xf32>
    %c0_76 = arith.constant 0 : index
    %c0_77 = arith.constant 0 : index
    %116 = vector.load %arg15[%c0_76, %c0_77] : memref<1x128xf32, #tpu.memory_space<vmem>>, vector<1x128xf32>
    %117 = vector.broadcast %116 : vector<1x128xf32> to vector<2x128xf32>
    %118 = arith.addf %115, %117 : vector<2x128xf32>
    %119 = vector.extract_strided_slice %118 {offsets = [0, 0], sizes = [2, 32], strides = [1, 1]} : vector<2x128xf32> to vector<2x32xf32>
    %120 = arith.negf %119 : vector<2x32xf32>
    %121 = math.exp %120 : vector<2x32xf32>
    %cst_78 = arith.constant 1.000000e+00 : f32
    %122 = vector.broadcast %cst_78 : f32 to vector<2x32xf32>
    %123 = arith.addf %122, %121 : vector<2x32xf32>
    %124 = arith.divf %122, %123 : vector<2x32xf32>
    %125 = vector.extract_strided_slice %118 {offsets = [0, 32], sizes = [2, 32], strides = [1, 1]} : vector<2x128xf32> to vector<2x32xf32>
    %126 = arith.negf %125 : vector<2x32xf32>
    %127 = math.exp %126 : vector<2x32xf32>
    %cst_79 = arith.constant 1.000000e+00 : f32
    %128 = vector.broadcast %cst_79 : f32 to vector<2x32xf32>
    %129 = arith.addf %128, %127 : vector<2x32xf32>
    %130 = arith.divf %128, %129 : vector<2x32xf32>
    %131 = vector.extract_strided_slice %118 {offsets = [0, 64], sizes = [2, 32], strides = [1, 1]} : vector<2x128xf32> to vector<2x32xf32>
    %132 = math.tanh %131 : vector<2x32xf32>
    %133 = vector.extract_strided_slice %118 {offsets = [0, 96], sizes = [2, 32], strides = [1, 1]} : vector<2x128xf32> to vector<2x32xf32>
    %134 = arith.negf %133 : vector<2x32xf32>
    %135 = math.exp %134 : vector<2x32xf32>
    %cst_80 = arith.constant 1.000000e+00 : f32
    %136 = vector.broadcast %cst_80 : f32 to vector<2x32xf32>
    %137 = arith.addf %136, %135 : vector<2x32xf32>
    %138 = arith.divf %136, %137 : vector<2x32xf32>
    %139 = arith.mulf %130, %108 : vector<2x32xf32>
    %140 = arith.mulf %124, %132 : vector<2x32xf32>
    %141 = arith.addf %139, %140 : vector<2x32xf32>
    %142 = math.tanh %141 : vector<2x32xf32>
    %143 = arith.mulf %138, %142 : vector<2x32xf32>
    %c1_81 = arith.constant 1 : index
    %c0_82 = arith.constant 0 : index
    %c0_83 = arith.constant 0 : index
    %144 = vector.load %arg17[%c1_81, %c0_82, %c0_83] : memref<2x2x32xf32, #tpu.memory_space<vmem>>, vector<1x2x32xf32>
    %145 = vector.shape_cast %144 : vector<1x2x32xf32> to vector<2x32xf32>
    %146 = vector.shape_cast %143 : vector<2x32xf32> to vector<1x2x32xf32>
    tpu.vector_store %arg17[%c1_81, %c0_82, %c0_83], %146 {strides = array<i32>} : memref<2x2x32xf32, #tpu.memory_space<vmem>>, vector<1x2x32xf32>,
    %c1_84 = arith.constant 1 : index
    %c0_85 = arith.constant 0 : index
    %c0_86 = arith.constant 0 : index
    %147 = vector.load %arg18[%c1_84, %c0_85, %c0_86] : memref<2x2x32xf32, #tpu.memory_space<vmem>>, vector<1x2x32xf32>
    %148 = vector.shape_cast %147 : vector<1x2x32xf32> to vector<2x32xf32>
    %149 = vector.shape_cast %141 : vector<2x32xf32> to vector<1x2x32xf32>
    tpu.vector_store %arg18[%c1_84, %c0_85, %c0_86], %149 {strides = array<i32>} : memref<2x2x32xf32, #tpu.memory_space<vmem>>, vector<1x2x32xf32>,
    %c0_87 = arith.constant 0 : index
    %c0_88 = arith.constant 0 : index
    %150 = vector.load %arg16[%c0_87, %c0_88] : memref<2x32xf32, #tpu.memory_space<vmem>>, vector<2x32xf32>
    tpu.vector_store %arg16[%c0_87, %c0_88], %143 {strides = array<i32>} : memref<2x32xf32, #tpu.memory_space<vmem>>, vector<2x32xf32>,
    return
  }
}

</mosaic_0001>

<llo_original>
// kernel: output_decoder_forward.3
$region0: #{output_decoder_forward.3}
  #allocation0 [shape = 'u32[]', space=smem, size = 0x4, offset = 0x4, fixed_abs, tag = 'smem constant byte address 0x4 - core index']
  #allocation1 [shape = 'u32[72,128]{1,0:T(1,128)}', space=vmem, size = 0x9000, scoped, tag = 'internal scratch']
  %s0 = inlined_call_operand.vmem [shape: f32[2,32], index: 0, kind: input, shape index: {}]
  %s1 = inlined_call_operand.vmem [shape: bf16[32,24], index: 1, kind: input, shape index: {}]
  %s2 = inlined_call_operand.vmem [shape: f32[1,24], index: 2, kind: input, shape index: {}]
  %s3 = inlined_call_operand.hbm [shape: f32[2,24], index: 3, kind: output, shape index: {}]
  %s4 = sld [smem:[#allocation0]]
  $region22: #{output_decoder_forward.3} parent=0
    _
  %s6 = ssub.s32 1, %s4
  %s7 = scalar_select 0, %s6, %s4
  $region1: #{output_decoder_forward.3} parent=0
    #allocation2 [shape = 'u8[1024]{0}', space=vmem, size = 0x400, scoped, tag = 'output window, operand 0, single buffered']
    #allocation3 [shape = 's32[1]{0}', space=sflag, size = 0x4, scoped, tag = 'scoped memory for output_decoder_forward.3']
    %8 = vsyncpa [#allocation3], 0
    // Predicated region
    $region2: #{output_decoder_forward.3} parent=1 // pred_check
      _
    $region3: #{output_decoder_forward.3} parent=1 // pred_check_branch
      %10 = sbr.rel (0) target = $region5
    $region4: #{output_decoder_forward.3} parent=1 // pred_region
      _
    $region5: #{output_decoder_forward.3} parent=1 // pred_fallthru
      _
    // Predicated region
    $region6: #{output_decoder_forward.3} parent=1 // pred_check
      _
    $region7: #{output_decoder_forward.3} parent=1 // pred_check_branch
      %12 = sbr.rel (0) target = $region9
    $region8: #{output_decoder_forward.3} parent=1 // pred_region
      _
    $region9: #{output_decoder_forward.3} parent=1 // pred_fallthru
      _
    // Predicated region
    $region10: #{output_decoder_forward.3} parent=1 // pred_check
      _
    $region11: #{output_decoder_forward.3} parent=1 // pred_check_branch
      %14 = sbr.rel (0) target = $region13
    $region12: #{output_decoder_forward.3} parent=1 // pred_region
      _
    $region13: #{output_decoder_forward.3} parent=1 // pred_fallthru
      _
    %v15 = vld [vmem:[%s0] sm:$0x3]
    %v16 = vld [vmem:[%s1] sm:$0xf]
    %v17 = vld [vmem:[%s1 + $0x4] sm:$0xf]
    %v18 = vld [vmem:[%s1 + $0x8] sm:$0xf]
    %v19 = vld [vmem:[%s1 + $0xc] sm:$0xf]
    %v20 = vunpack.c.l.bf16 %v16
    %v21 = vunpack.c.l.bf16 %v17
    %v22 = vunpack.c.l.bf16 %v18
    %v23 = vunpack.c.l.bf16 %v19
    %v24 = vld [vmem:[%s2] sm:$0x1]
    %v26 = vperm.slane %v24, 0
    %vm28 = vcmask 261120
    %v30 = vsel %vm28, %v15, 0
    %32 = vmatpush.msra.mxu0 0.0
    %33 = vmatpush.msra.mxu0 0.0
    %34 = vmatpush.msra.mxu0 0.0
    %35 = vmatpush.msra.mxu0 0.0
    %36 = vmatpush.msra.mxu0 0.0
    %37 = vmatpush.msra.mxu0 0.0
    %38 = vmatpush.msra.mxu0 0.0
    %39 = vmatpush.msra.mxu0 0.0
    %40 = vmatpush.msra.mxu0 0.0
    %41 = vmatpush.msra.mxu0 0.0
    %42 = vmatpush.msra.mxu0 0.0
    %43 = vmatpush.msra.mxu0 0.0
    %44 = vmatpush.msra.mxu0 %v23
    %45 = vmatpush.msra.mxu0 %v22
    %46 = vmatpush.msra.mxu0 %v21
    %47 = vmatpush.msra.mxu0 %v20
    %48 = vmatmul.f32.gmra.mxu0 %v30
    %v49 = vpop.f32.mrf.mxu0
    %v50 = vadd.f32 %v26, %v49
    %51 = vdwg.mxu0
    %vm52 = vcmask 189440
    %53 = vst.msk [vmem:[#allocation2] sm:$0x3] %vm52, %v50
    // Predicated region
    $region14: #{output_decoder_forward.3} parent=1 // pred_check
      _
    $region15: #{output_decoder_forward.3} parent=1 // pred_check_branch
      %55 = sbr.rel (0) target = $region17
    $region16: #{output_decoder_forward.3} parent=1 // pred_region
      %57 = vsyncadd [#allocation3], 0
      %s59 = sshll.u32 [#allocation2], 4
      %s60 = int_to_ptr.vmem [resolvable:$true] %s59
      %s61 = sshll.u32 %s3, 4
      %s62 = int_to_ptr.hbm [resolvable:$true] %s61
      %64 = dma.vmem_to_hbm [thread:$0]  %s60, 32, %s62, [#allocation3]
    $region17: #{output_decoder_forward.3} parent=1 // pred_fallthru
      _
    // Predicated region
    $region18: #{output_decoder_forward.3} parent=1 // pred_check
      _
    $region19: #{output_decoder_forward.3} parent=1 // pred_check_branch
      %66 = sbr.rel (0) target = $region21
    $region20: #{output_decoder_forward.3} parent=1 // pred_region
      %68 = dma.done [#allocation3], 32
    $region21: #{output_decoder_forward.3} parent=1 // pred_fallthru
      _
    %69 = vsyncpa [#allocation3], 1

// kernel: output_decoder_forward.2
$region0: #{output_decoder_forward.2}
  #allocation0 [shape = 'u32[]', space=smem, size = 0x4, offset = 0x4, fixed_abs, tag = 'smem constant byte address 0x4 - core index']
  #allocation1 [shape = 'u32[72,128]{1,0:T(1,128)}', space=vmem, size = 0x9000, scoped, tag = 'internal scratch']
  #allocation2 [shape = 'f32[2,32]{1,0:T(2,128)}', space=vmem, size = 0x400, scoped, tag = 'scratch operand']
  #allocation3 [shape = 's32[2]{0}', space=sflag, size = 0x8, scoped, tag = 'scratch operand']
  #allocation21 [shape = 's32[]', space=sflag, size = 0x4, offset = 0, fixed_abs, tag = 'sflag constant byte address 0x0 - dummy sync flag']
  #allocation22 [shape = 's32[]', space=sflag, size = 0x4, offset = 0, fixed_abs, tag = 'sflag constant byte address 0x0 - dummy sync flag']
  #allocation23 [shape = 'u32[]', space=smem, size = 0x4, offset = 0x44, fixed_abs, tag = 'smem constant byte address 0x44 - assertion arg 0']
  #allocation24 [shape = 'u32[]', space=smem, size = 0x4, offset = 0x48, fixed_abs, tag = 'smem constant byte address 0x48 - assertion arg 1']
  #allocation25 [shape = 's32[]', space=sflag, size = 0x4, offset = 0, fixed_abs, tag = 'sflag constant byte address 0x0 - dummy sync flag']
  #allocation26 [shape = 's32[]', space=sflag, size = 0x4, offset = 0, fixed_abs, tag = 'sflag constant byte address 0x0 - dummy sync flag']
  %s0 = inlined_call_operand.vmem [shape: s32[2], index: 0, kind: input, shape index: {}]
  %s1 = inlined_call_operand.hbm [shape: f32[24,32], index: 1, kind: input, shape index: {}]
  %s2 = inlined_call_operand.vmem [shape: f32[2,2,32], index: 2, kind: input, shape index: {}, may-alias: {2,17}]
  %s3 = inlined_call_operand.vmem [shape: f32[2,2,32], index: 3, kind: input, shape index: {}, may-alias: {3,18}]
  %s4 = inlined_call_operand.hbm [shape: f32[2,8,32], index: 4, kind: input, shape index: {}]
  %s5 = inlined_call_operand.hbm [shape: f32[2,8,32], index: 5, kind: input, shape index: {}]
  %s6 = inlined_call_operand.hbm [shape: bf16[32,32], index: 6, kind: input, shape index: {}]
  %s7 = inlined_call_operand.vmem [shape: f32[1,32], index: 7, kind: input, shape index: {}]
  %s8 = inlined_call_operand.vmem [shape: f32[1,32], index: 8, kind: input, shape index: {}]
  %s9 = inlined_call_operand.hbm [shape: bf16[32,128], index: 9, kind: input, shape index: {}]
  %s10 = inlined_call_operand.hbm [shape: bf16[32,128], index: 10, kind: input, shape index: {}]
  %s11 = inlined_call_operand.hbm [shape: bf16[32,128], index: 11, kind: input, shape index: {}]
  %s12 = inlined_call_operand.vmem [shape: f32[1,128], index: 12, kind: input, shape index: {}]
  %s13 = inlined_call_operand.hbm [shape: bf16[32,128], index: 13, kind: input, shape index: {}]
  %s14 = inlined_call_operand.hbm [shape: bf16[32,128], index: 14, kind: input, shape index: {}]
  %s15 = inlined_call_operand.vmem [shape: f32[1,128], index: 15, kind: input, shape index: {}]
  %s16 = inlined_call_operand.vmem [shape: f32[2,32], index: 16, kind: output, shape index: {0}]
  %s17 = inlined_call_operand.vmem [shape: f32[2,2,32], index: 17, kind: output, shape index: {1}, may-alias: {2,17}]
  %s18 = inlined_call_operand.vmem [shape: f32[2,2,32], index: 18, kind: output, shape index: {2}, may-alias: {3,18}]
  %s19 = inlined_call_operand.hbm [shape: f32[2,8], index: 19, kind: output, shape index: {3}]
  %20 = xla_tuple %s16, %s17, %s18, %s19
  %s21 = sld [smem:[#allocation0]]
  $region138: #{output_decoder_forward.2} parent=0
    _
  %s23 = ssub.s32 1, %s21
  %s24 = scalar_select 0, %s23, %s21
  $region1: #{output_decoder_forward.2} parent=0
    #allocation4 [shape = 'u8[512]{0}', space=smem, size = 0x200, scoped, tag = 'input window, operand 0, single buffered']
    #allocation5 [shape = 's32[1]{0}', space=sflag, size = 0x4, scoped, tag = 'scoped memory for output_decoder_forward.2']
    #allocation6 [shape = 's32[1]{0}', space=sflag, size = 0x4, scoped, tag = 'scoped memory for output_decoder_forward.2']
    #allocation7 [shape = 's32[1]{0}', space=sflag, size = 0x4, scoped, tag = 'scoped memory for output_decoder_forward.2']
    #allocation8 [shape = 'u8[8192]{0}', space=vmem, size = 0x2000, scoped, tag = 'input window, operand 4, single buffered']
    #allocation9 [shape = 'u8[8192]{0}', space=vmem, size = 0x2000, scoped, tag = 'input window, operand 5, single buffered']
    #allocation10 [shape = 's32[1]{0}', space=sflag, size = 0x4, scoped, tag = 'scoped memory for output_decoder_forward.2']
    #allocation11 [shape = 'u8[8192]{0}', space=vmem, size = 0x2000, scoped, tag = 'input window, operand 6, single buffered']
    #allocation12 [shape = 'u8[8192]{0}', space=vmem, size = 0x2000, scoped, tag = 'input window, operand 9, single buffered']
    #allocation13 [shape = 's32[1]{0}', space=sflag, size = 0x4, scoped, tag = 'scoped memory for output_decoder_forward.2']
    #allocation14 [shape = 'u8[8192]{0}', space=vmem, size = 0x2000, scoped, tag = 'input window, operand 10, single buffered']
    #allocation15 [shape = 'u8[8192]{0}', space=vmem, size = 0x2000, scoped, tag = 'input window, operand 11, single buffered']
    #allocation16 [shape = 's32[1]{0}', space=sflag, size = 0x4, scoped, tag = 'scoped memory for output_decoder_forward.2']
    #allocation17 [shape = 'u8[8192]{0}', space=vmem, size = 0x2000, scoped, tag = 'input window, operand 13, single buffered']
    #allocation18 [shape = 'u8[8192]{0}', space=vmem, size = 0x2000, scoped, tag = 'input window, operand 14, single buffered']
    #allocation19 [shape = 's32[1]{0}', space=sflag, size = 0x4, scoped, tag = 'scoped memory for output_decoder_forward.2']
    #allocation20 [shape = 'u8[1024]{0}', space=vmem, size = 0x400, scoped, tag = 'output window, operand 3, single buffered']
    %25 = vsyncpa [#allocation7], 0
    %26 = vsyncpa [#allocation5], 0
    %27 = vsyncpa [#allocation10], 0
    %28 = vsyncpa [#allocation13], 0
    %29 = vsyncpa [#allocation16], 0
    %30 = vsyncpa [#allocation19], 0
    %31 = vsyncpa [#allocation6], 0
    // Predicated region
    $region2: #{output_decoder_forward.2} parent=1 // pred_check
      _
    $region3: #{output_decoder_forward.2} parent=1 // pred_check_branch
      %33 = sbr.rel (0) target = $region5
    $region4: #{output_decoder_forward.2} parent=1 // pred_region
      %35 = vsyncadd [#allocation7], 0
      %s37 = sshll.u32 %s0, 4
      %s38 = int_to_ptr.vmem [resolvable:$true] %s37
      %40 = dma.vmem_to_smem %s38, 16, [#allocation4], [#allocation7]
    $region5: #{output_decoder_forward.2} parent=1 // pred_fallthru
      _
    // Predicated region
    $region6: #{output_decoder_forward.2} parent=1 // pred_check
      _
    $region7: #{output_decoder_forward.2} parent=1 // pred_check_branch
      %42 = sbr.rel (0) target = $region9
    $region8: #{output_decoder_forward.2} parent=1 // pred_region
      _
    $region9: #{output_decoder_forward.2} parent=1 // pred_fallthru
      _
    // Predicated region
    $region10: #{output_decoder_forward.2} parent=1 // pred_check
      _
    $region11: #{output_decoder_forward.2} parent=1 // pred_check_branch
      %44 = sbr.rel (0) target = $region13
    $region12: #{output_decoder_forward.2} parent=1 // pred_region
      _
    $region13: #{output_decoder_forward.2} parent=1 // pred_fallthru
      _
    // Predicated region
    $region14: #{output_decoder_forward.2} parent=1 // pred_check
      _
    $region15: #{output_decoder_forward.2} parent=1 // pred_check_branch
      %46 = sbr.rel (0) target = $region17
    $region16: #{output_decoder_forward.2} parent=1 // pred_region
      %48 = vsyncadd [#allocation5], 0
      %s49 = sshll.u32 %s4, 4
      %s50 = int_to_ptr.hbm [resolvable:$true] %s49
      %s51 = sshll.u32 [#allocation8], 4
      %s52 = int_to_ptr.vmem [resolvable:$true] %s51
      %57 = dma.hbm_to_vmem [thread:$0]  %s50, 256, %s52, [#allocation5], 128, 128, 8
    $region17: #{output_decoder_forward.2} parent=1 // pred_fallthru
      _
    // Predicated region
    $region18: #{output_decoder_forward.2} parent=1 // pred_check
      _
    $region19: #{output_decoder_forward.2} parent=1 // pred_check_branch
      %59 = sbr.rel (0) target = $region21
    $region20: #{output_decoder_forward.2} parent=1 // pred_region
      %61 = vsyncadd [#allocation10], 0
      %s62 = sshll.u32 %s5, 4
      %s63 = int_to_ptr.hbm [resolvable:$true] %s62
      %s64 = sshll.u32 [#allocation9], 4
      %s65 = int_to_ptr.vmem [resolvable:$true] %s64
      %70 = dma.hbm_to_vmem [thread:$0]  %s63, 256, %s65, [#allocation10], 128, 128, 8
    $region21: #{output_decoder_forward.2} parent=1 // pred_fallthru
      _
    // Predicated region
    $region22: #{output_decoder_forward.2} parent=1 // pred_check
      _
    $region23: #{output_decoder_forward.2} parent=1 // pred_check_branch
      %72 = sbr.rel (0) target = $region25
    $region24: #{output_decoder_forward.2} parent=1 // pred_region
      %74 = vsyncadd [#allocation10], 0
      %s75 = sshll.u32 %s6, 4
      %s76 = int_to_ptr.hbm [resolvable:$true] %s75
      %s77 = sshll.u32 [#allocation11], 4
      %s78 = int_to_ptr.vmem [resolvable:$true] %s77
      %83 = dma.hbm_to_vmem [thread:$0]  %s76, 256, %s78, [#allocation10], 64, 64, 4
    $region25: #{output_decoder_forward.2} parent=1 // pred_fallthru
      _
    // Predicated region
    $region26: #{output_decoder_forward.2} parent=1 // pred_check
      _
    $region27: #{output_decoder_forward.2} parent=1 // pred_check_branch
      %85 = sbr.rel (0) target = $region29
    $region28: #{output_decoder_forward.2} parent=1 // pred_region
      _
    $region29: #{output_decoder_forward.2} parent=1 // pred_fallthru
      _
    // Predicated region
    $region30: #{output_decoder_forward.2} parent=1 // pred_check
      _
    $region31: #{output_decoder_forward.2} parent=1 // pred_check_branch
      %87 = sbr.rel (0) target = $region33
    $region32: #{output_decoder_forward.2} parent=1 // pred_region
      _
    $region33: #{output_decoder_forward.2} parent=1 // pred_fallthru
      _
    // Predicated region
    $region34: #{output_decoder_forward.2} parent=1 // pred_check
      _
    $region35: #{output_decoder_forward.2} parent=1 // pred_check_branch
      %89 = sbr.rel (0) target = $region37
    $region36: #{output_decoder_forward.2} parent=1 // pred_region
      %91 = vsyncadd [#allocation13], 0
      %s92 = sshll.u32 %s9, 4
      %s93 = int_to_ptr.hbm [resolvable:$true] %s92
      %s94 = sshll.u32 [#allocation12], 4
      %s95 = int_to_ptr.vmem [resolvable:$true] %s94
      %100 = dma.hbm_to_vmem [thread:$0]  %s93, 256, %s95, [#allocation13], 64, 64, 4
    $region37: #{output_decoder_forward.2} parent=1 // pred_fallthru
      _
    // Predicated region
    $region38: #{output_decoder_forward.2} parent=1 // pred_check
      _
    $region39: #{output_decoder_forward.2} parent=1 // pred_check_branch
      %102 = sbr.rel (0) target = $region41
    $region40: #{output_decoder_forward.2} parent=1 // pred_region
      %104 = vsyncadd [#allocation13], 0
      %s105 = sshll.u32 %s10, 4
      %s106 = int_to_ptr.hbm [resolvable:$true] %s105
      %s107 = sshll.u32 [#allocation14], 4
      %s108 = int_to_ptr.vmem [resolvable:$true] %s107
      %113 = dma.hbm_to_vmem [thread:$0]  %s106, 256, %s108, [#allocation13], 64, 64, 4
    $region41: #{output_decoder_forward.2} parent=1 // pred_fallthru
      _
    // Predicated region
    $region42: #{output_decoder_forward.2} parent=1 // pred_check
      _
    $region43: #{output_decoder_forward.2} parent=1 // pred_check_branch
      %115 = sbr.rel (0) target = $region45
    $region44: #{output_decoder_forward.2} parent=1 // pred_region
      %117 = vsyncadd [#allocation16], 0
      %s118 = sshll.u32 %s11, 4
      %s119 = int_to_ptr.hbm [resolvable:$true] %s118
      %s120 = sshll.u32 [#allocation15], 4
      %s121 = int_to_ptr.vmem [resolvable:$true] %s120
      %126 = dma.hbm_to_vmem [thread:$0]  %s119, 256, %s121, [#allocation16], 64, 64, 4
    $region45: #{output_decoder_forward.2} parent=1 // pred_fallthru
      _
    // Predicated region
    $region46: #{output_decoder_forward.2} parent=1 // pred_check
      _
    $region47: #{output_decoder_forward.2} parent=1 // pred_check_branch
      %128 = sbr.rel (0) target = $region49
    $region48: #{output_decoder_forward.2} parent=1 // pred_region
      _
    $region49: #{output_decoder_forward.2} parent=1 // pred_fallthru
      _
    // Predicated region
    $region50: #{output_decoder_forward.2} parent=1 // pred_check
      _
    $region51: #{output_decoder_forward.2} parent=1 // pred_check_branch
      %130 = sbr.rel (0) target = $region53
    $region52: #{output_decoder_forward.2} parent=1 // pred_region
      %132 = vsyncadd [#allocation16], 0
      %s133 = sshll.u32 %s13, 4
      %s134 = int_to_ptr.hbm [resolvable:$true] %s133
      %s135 = sshll.u32 [#allocation17], 4
      %s136 = int_to_ptr.vmem [resolvable:$true] %s135
      %141 = dma.hbm_to_vmem [thread:$0]  %s134, 256, %s136, [#allocation16], 64, 64, 4
    $region53: #{output_decoder_forward.2} parent=1 // pred_fallthru
      _
    // Predicated region
    $region54: #{output_decoder_forward.2} parent=1 // pred_check
      _
    $region55: #{output_decoder_forward.2} parent=1 // pred_check_branch
      %143 = sbr.rel (0) target = $region57
    $region56: #{output_decoder_forward.2} parent=1 // pred_region
      %145 = vsyncadd [#allocation19], 0
      %s146 = sshll.u32 %s14, 4
      %s147 = int_to_ptr.hbm [resolvable:$true] %s146
      %s148 = sshll.u32 [#allocation18], 4
      %s149 = int_to_ptr.vmem [resolvable:$true] %s148
      %154 = dma.hbm_to_vmem [thread:$0]  %s147, 256, %s149, [#allocation19], 64, 64, 4
    $region57: #{output_decoder_forward.2} parent=1 // pred_fallthru
      _
    // Predicated region
    $region58: #{output_decoder_forward.2} parent=1 // pred_check
      _
    $region59: #{output_decoder_forward.2} parent=1 // pred_check_branch
      %156 = sbr.rel (0) target = $region61
    $region60: #{output_decoder_forward.2} parent=1 // pred_region
      _
    $region61: #{output_decoder_forward.2} parent=1 // pred_fallthru
      _
    // Predicated region
    $region62: #{output_decoder_forward.2} parent=1 // pred_check
      _
    $region63: #{output_decoder_forward.2} parent=1 // pred_check_branch
      %158 = sbr.rel (0) target = $region65
    $region64: #{output_decoder_forward.2} parent=1 // pred_region
      %160 = dma.done [#allocation7], 16
    $region65: #{output_decoder_forward.2} parent=1 // pred_fallthru
      _
    // Predicated region
    $region66: #{output_decoder_forward.2} parent=1 // pred_check
      _
    $region67: #{output_decoder_forward.2} parent=1 // pred_check_branch
      %162 = sbr.rel (0) target = $region69
    $region68: #{output_decoder_forward.2} parent=1 // pred_region
      %164 = dma.done [#allocation5], 256
    $region69: #{output_decoder_forward.2} parent=1 // pred_fallthru
      _
    // Predicated region
    $region70: #{output_decoder_forward.2} parent=1 // pred_check
      _
    $region71: #{output_decoder_forward.2} parent=1 // pred_check_branch
      %166 = sbr.rel (0) target = $region73
    $region72: #{output_decoder_forward.2} parent=1 // pred_region
      %168 = dma.done [#allocation10], 256
    $region73: #{output_decoder_forward.2} parent=1 // pred_fallthru
      _
    // Predicated region
    $region74: #{output_decoder_forward.2} parent=1 // pred_check
      _
    $region75: #{output_decoder_forward.2} parent=1 // pred_check_branch
      %170 = sbr.rel (0) target = $region77
    $region76: #{output_decoder_forward.2} parent=1 // pred_region
      %172 = dma.done [#allocation10], 256
    $region77: #{output_decoder_forward.2} parent=1 // pred_fallthru
      _
    // Predicated region
    $region78: #{output_decoder_forward.2} parent=1 // pred_check
      _
    $region79: #{output_decoder_forward.2} parent=1 // pred_check_branch
      %174 = sbr.rel (0) target = $region81
    $region80: #{output_decoder_forward.2} parent=1 // pred_region
      %176 = dma.done [#allocation13], 256
    $region81: #{output_decoder_forward.2} parent=1 // pred_fallthru
      _
    // Predicated region
    $region82: #{output_decoder_forward.2} parent=1 // pred_check
      _
    $region83: #{output_decoder_forward.2} parent=1 // pred_check_branch
      %178 = sbr.rel (0) target = $region85
    $region84: #{output_decoder_forward.2} parent=1 // pred_region
      %180 = dma.done [#allocation13], 256
    $region85: #{output_decoder_forward.2} parent=1 // pred_fallthru
      _
    // Predicated region
    $region86: #{output_decoder_forward.2} parent=1 // pred_check
      _
    $region87: #{output_decoder_forward.2} parent=1 // pred_check_branch
      %182 = sbr.rel (0) target = $region89
    $region88: #{output_decoder_forward.2} parent=1 // pred_region
      %184 = dma.done [#allocation16], 256
    $region89: #{output_decoder_forward.2} parent=1 // pred_fallthru
      _
    // Predicated region
    $region90: #{output_decoder_forward.2} parent=1 // pred_check
      _
    $region91: #{output_decoder_forward.2} parent=1 // pred_check_branch
      %186 = sbr.rel (0) target = $region93
    $region92: #{output_decoder_forward.2} parent=1 // pred_region
      %188 = dma.done [#allocation16], 256
    $region93: #{output_decoder_forward.2} parent=1 // pred_fallthru
      _
    // Predicated region
    $region94: #{output_decoder_forward.2} parent=1 // pred_check
      _
    $region95: #{output_decoder_forward.2} parent=1 // pred_check_branch
      %190 = sbr.rel (0) target = $region97
    $region96: #{output_decoder_forward.2} parent=1 // pred_region
      %192 = dma.done [#allocation19], 256
    $region97: #{output_decoder_forward.2} parent=1 // pred_fallthru
      _
    %193 = sfence
    %s194 = sld [smem:[#allocation4]]
    %s195 = scalar_lea.hbm %s1, %s194
    // Predicated region
    $region98: #{output_decoder_forward.2} parent=1 // pred_check
      _
    $region99: #{output_decoder_forward.2} parent=1 // pred_check_branch
      %197 = sbr.rel target = $region101
    $region100: #{output_decoder_forward.2} parent=1 // pred_region
      %198 = sst [smem:[#allocation23]] [#allocation22]
      %199 = sst [smem:[#allocation24]] [#allocation21]
    $region101: #{output_decoder_forward.2} parent=1 // pred_fallthru
      _
    %201 = shalt.err (0)
    %s203 = sshll.u32 %s195, 4
    %s204 = int_to_ptr.hbm [resolvable:$true] %s203
    %s205 = sshll.u32 [#allocation2], 4
    %s206 = int_to_ptr.vmem [resolvable:$true] %s205
    %208 = dma.hbm_to_vmem [thread:$0]  %s204, 16, %s206, [#allocation3]
    %s209 = sld [smem:[#allocation4 + $0x1]]
    %s210 = scalar_lea.hbm %s1, %s209
    %s211 = scalar_lea.vmem [#allocation2], 1
    %s212 = scalar_lea.sflag [#allocation3], 1
    // Predicated region
    $region102: #{output_decoder_forward.2} parent=1 // pred_check
      _
    $region103: #{output_decoder_forward.2} parent=1 // pred_check_branch
      %214 = sbr.rel target = $region105
    $region104: #{output_decoder_forward.2} parent=1 // pred_region
      %215 = sst [smem:[#allocation23]] [#allocation26]
      %216 = sst [smem:[#allocation24]] [#allocation25]
    $region105: #{output_decoder_forward.2} parent=1 // pred_fallthru
      _
    %218 = shalt.err (0)
    %s220 = sshll.u32 %s210, 4
    %s221 = int_to_ptr.hbm [resolvable:$true] %s220
    %s222 = sshll.u32 %s211, 4
    %s223 = int_to_ptr.vmem [resolvable:$true] %s222
    %225 = dma.hbm_to_vmem [thread:$0]  %s221, 16, %s223, %s212
    %v226 = vld [vmem:[#allocation8] sm:$0xff]
    %v227 = vld [vmem:[#allocation8 + $0x8] sm:$0xff]
    %s228 = scalar_lea.vmem %s2, 2
    %v229 = vld [vmem:[%s228] sm:$0x3]
    %v230 = vld [vmem:[#allocation11] sm:$0xf]
    %v231 = vld [vmem:[#allocation11 + $0x4] sm:$0xf]
    %v232 = vld [vmem:[#allocation11 + $0x8] sm:$0xf]
    %v233 = vld [vmem:[#allocation11 + $0xc] sm:$0xf]
    %v234 = vunpack.c.l.bf16 %v230
    %v235 = vunpack.c.l.bf16 %v231
    %v236 = vunpack.c.l.bf16 %v232
    %v237 = vunpack.c.l.bf16 %v233
    %v238 = vld [vmem:[%s7] sm:$0x1]
    %v240 = vperm.slane %v238, 0
    %vm242 = vcmask 261120
    %v244 = vsel %vm242, %v229, 0
    %246 = vmatpush.msra.mxu0 0.0
    %247 = vmatpush.msra.mxu0 0.0
    %248 = vmatpush.msra.mxu0 0.0
    %249 = vmatpush.msra.mxu0 0.0
    %250 = vmatpush.msra.mxu0 0.0
    %251 = vmatpush.msra.mxu0 0.0
    %252 = vmatpush.msra.mxu0 0.0
    %253 = vmatpush.msra.mxu0 0.0
    %254 = vmatpush.msra.mxu0 0.0
    %255 = vmatpush.msra.mxu0 0.0
    %256 = vmatpush.msra.mxu0 0.0
    %257 = vmatpush.msra.mxu0 0.0
    %258 = vmatpush.msra.mxu0 %v237
    %259 = vmatpush.msra.mxu0 %v236
    %260 = vmatpush.msra.mxu0 %v235
    %261 = vmatpush.msra.mxu0 %v234
    %262 = vmatmul.f32.gmra.mxu0 %v244
    %v263 = vpop.f32.mrf.mxu0
    %v264 = vadd.f32 %v240, %v263
    %265 = vdwg.mxu0
    %v267 = vrot.slane %v264, 1
    %v268 = vld [vmem:[#allocation9] sm:$0xff]
    %v269 = vld [vmem:[#allocation9 + $0x8] sm:$0xff]
    %v270 = vperm.slane %v264, 0
    %v271 = vperm.slane %v267, 0
    %v274 = vadd.f32 %v270, %v268
    %v275 = vadd.f32 %v271, %v269
    %v276 = vtanh.pop %v274
    %v277 = vtanh.pop %v275
    %v278 = vld [vmem:[%s8] sm:$0x1]
    %v280 = vperm.slane %v278, 0
    %v282 = vmul.f32 %v276, %v280
    %v283 = vmul.f32 %v277, %v280
    %v284 = vsel %vm242, %v282, 0.0
    %285 = vadd.xlane.f32.xlu0 %v284
    %v286 = vpop.xlane.xlu0 %285
    %v287 = vsel %vm242, %v283, 0.0
    %288 = vadd.xlane.f32.xlu0 %v287
    %v289 = vpop.xlane.xlu0 %288
    %v292 = vlaneseq
    %v293 = vand.u32 %v292, 127
    %v294 = vperm.slane %v286, %v293
    %v295 = vperm.slane %v289, %v293
    %vm296 = vcmask 1041409
    %v297 = vsel %vm296, %v295, %v294
    %vm299 = vcmask 58368
    %v300 = vsel %vm299, %v297, -inf
    %301 = vmax.xlane.f32.xlu0 %v300
    %v302 = vpop.xlane.xlu0 %301
    %v304 = vperm.slane %v302, 0
    %v305 = vperm.slane %v302, 1
    %v308 = vsub.f32 %v286, %v304
    %v309 = vsub.f32 %v289, %v305
    %v310 = vmul.f32 %v308, 1.442695
    %v311 = vpow.pop %v310
    %v312 = vmul.f32 %v309, 1.442695
    %v313 = vpow.pop %v312
    %316 = vset.pattern.permute.xlu0 0
    %317 = vperm.xlu0 %316, %v311
    %v318 = vpop.permute.xlu0 %317
    %319 = vset.pattern.permute.xlu0 0
    %320 = vperm.xlu0 %319, %v313
    %v321 = vpop.permute.xlu0 %320
    %v322 = vperm.slane %v318, %v293
    %v323 = vperm.slane %v321, %v293
    %v324 = vsel %vm296, %v323, %v322
    %v326 = vsel %vm299, %v324, 0.0
    %327 = vadd.xlane.f32.xlu0 %v326
    %v328 = vpop.xlane.xlu0 %327
    %v329 = vrcp.pop %v328
    %v330 = vmul.f32 %v328, %v329
    %v331 = vsub.f32 2.0, %v330
    %v332 = vmul.f32 %v329, %v331
    %v334 = vperm.slane %v332, 0
    %v335 = vperm.slane %v332, 1
    %v338 = vmul.f32 %v311, %v334
    %v339 = vmul.f32 %v313, %v335
    %342 = vset.pattern.permute.xlu0 0
    %343 = vperm.xlu0 %342, %v338
    %v344 = vpop.permute.xlu0 %343
    %345 = vset.pattern.permute.xlu0 0
    %346 = vperm.xlu0 %345, %v339
    %v347 = vpop.permute.xlu0 %346
    %v348 = vperm.slane %v344, %v293
    %v349 = vperm.slane %v347, %v293
    %v350 = vsel %vm296, %v349, %v348
    %352 = vst.msk [vmem:[#allocation20] sm:$0x3] %vm299, %v350
    %vm353 = vcmask 64512
    %v354 = vsel %vm353, %v348, 0
    %356 = vmatpush.msra.mxu0 0.0
    %357 = vmatpush.msra.mxu0 0.0
    %358 = vmatpush.msra.mxu0 0.0
    %359 = vmatpush.msra.mxu0 0.0
    %360 = vmatpush.msra.mxu0 0.0
    %361 = vmatpush.msra.mxu0 0.0
    %362 = vmatpush.msra.mxu0 0.0
    %363 = vmatpush.msra.mxu0 0.0
    %364 = vmatpush.msra.mxu0 0.0
    %365 = vmatpush.msra.mxu0 0.0
    %366 = vmatpush.msra.mxu0 0.0
    %367 = vmatpush.msra.mxu0 0.0
    %368 = vmatpush.msra.mxu0 0.0
    %369 = vmatpush.msra.mxu0 0.0
    %370 = vmatpush.msra.mxu0 0.0
    %371 = vmatpush.msra.mxu0 %v226
    %372 = vmatmul.f32.gmra.mxu0 %v354
    %v373 = vpop.f32.mrf.mxu0
    %v374 = vadd.f32 0.0, %v373
    %375 = vdwg.mxu0
    %v376 = vsel %vm353, %v349, 0
    %378 = vmatpush.msra.mxu0 0.0
    %379 = vmatpush.msra.mxu0 0.0
    %380 = vmatpush.msra.mxu0 0.0
    %381 = vmatpush.msra.mxu0 0.0
    %382 = vmatpush.msra.mxu0 0.0
    %383 = vmatpush.msra.mxu0 0.0
    %384 = vmatpush.msra.mxu0 0.0
    %385 = vmatpush.msra.mxu0 0.0
    %386 = vmatpush.msra.mxu0 0.0
    %387 = vmatpush.msra.mxu0 0.0
    %388 = vmatpush.msra.mxu0 0.0
    %389 = vmatpush.msra.mxu0 0.0
    %390 = vmatpush.msra.mxu0 0.0
    %391 = vmatpush.msra.mxu0 0.0
    %392 = vmatpush.msra.mxu0 0.0
    %393 = vmatpush.msra.mxu0 %v227
    %394 = vmatmul.f32.gmra.mxu0 %v376
    %v395 = vpop.f32.mrf.mxu0
    %v396 = vadd.f32 0.0, %v395
    %397 = vdwg.mxu0
    %s398 = smul.u32 1, 1
    %s399 = sshll.u32 %s398, 4
    %400 = dma.done [#allocation3], %s399
    %s401 = sshll.u32 %s398, 4
    %402 = dma.done %s212, %s401
    %v403 = vld [vmem:[#allocation2] sm:$0x3]
    %v404 = vld [vmem:[%s2] sm:$0x3]
    %v405 = vld [vmem:[%s3] sm:$0x3]
    %v406 = vld [vmem:[#allocation12] sm:$0xf]
    %v407 = vld [vmem:[#allocation12 + $0x4] sm:$0xf]
    %v408 = vld [vmem:[#allocation12 + $0x8] sm:$0xf]
    %v409 = vld [vmem:[#allocation12 + $0xc] sm:$0xf]
    %v410 = vunpack.c.l.bf16 %v406
    %v411 = vunpack.c.l.bf16 %v407
    %v412 = vunpack.c.l.bf16 %v408
    %v413 = vunpack.c.l.bf16 %v409
    %v414 = vld [vmem:[#allocation14] sm:$0xf]
    %v415 = vld [vmem:[#allocation14 + $0x4] sm:$0xf]
    %v416 = vld [vmem:[#allocation14 + $0x8] sm:$0xf]
    %v417 = vld [vmem:[#allocation14 + $0xc] sm:$0xf]
    %v418 = vunpack.c.l.bf16 %v414
    %v419 = vunpack.c.l.bf16 %v415
    %v420 = vunpack.c.l.bf16 %v416
    %v421 = vunpack.c.l.bf16 %v417
    %v424 = vrot.slane %v396, 7
    %v425 = vsel %vm296, %v424, %v374
    %v426 = vsel %vm242, %v425, 0
    %428 = vmatpush.msra.mxu0 0.0
    %429 = vmatpush.msra.mxu0 0.0
    %430 = vmatpush.msra.mxu0 0.0
    %431 = vmatpush.msra.mxu0 0.0
    %432 = vmatpush.msra.mxu0 0.0
    %433 = vmatpush.msra.mxu0 0.0
    %434 = vmatpush.msra.mxu0 0.0
    %435 = vmatpush.msra.mxu0 0.0
    %436 = vmatpush.msra.mxu0 0.0
    %437 = vmatpush.msra.mxu0 0.0
    %438 = vmatpush.msra.mxu0 0.0
    %439 = vmatpush.msra.mxu0 0.0
    %440 = vmatpush.msra.mxu0 %v421
    %441 = vmatpush.msra.mxu0 %v420
    %442 = vmatpush.msra.mxu0 %v419
    %443 = vmatpush.msra.mxu0 %v418
    %444 = vmatmul.f32.gmra.mxu0 %v426
    %v445 = vpop.f32.mrf.mxu0
    %v446 = vadd.f32 0.0, %v445
    %447 = vdwg.mxu0
    %v449 = vsel %vm242, %v403, 0
    %451 = vmatpush.msra.mxu0 0.0
    %452 = vmatpush.msra.mxu0 0.0
    %453 = vmatpush.msra.mxu0 0.0
    %454 = vmatpush.msra.mxu0 0.0
    %455 = vmatpush.msra.mxu0 0.0
    %456 = vmatpush.msra.mxu0 0.0
    %457 = vmatpush.msra.mxu0 0.0
    %458 = vmatpush.msra.mxu0 0.0
    %459 = vmatpush.msra.mxu0 0.0
    %460 = vmatpush.msra.mxu0 0.0
    %461 = vmatpush.msra.mxu0 0.0
    %462 = vmatpush.msra.mxu0 0.0
    %463 = vmatpush.msra.mxu0 %v413
    %464 = vmatpush.msra.mxu0 %v412
    %465 = vmatpush.msra.mxu0 %v411
    %466 = vmatpush.msra.mxu0 %v410
    %467 = vmatmul.f32.gmra.mxu0 %v449
    %v468 = vpop.f32.mrf.mxu0
    %v469 = vadd.f32 %v446, %v468
    %470 = vdwg.mxu0
    %v471 = vld [vmem:[#allocation15] sm:$0xf]
    %v472 = vld [vmem:[#allocation15 + $0x4] sm:$0xf]
    %v473 = vld [vmem:[#allocation15 + $0x8] sm:$0xf]
    %v474 = vld [vmem:[#allocation15 + $0xc] sm:$0xf]
    %v475 = vunpack.c.l.bf16 %v471
    %v476 = vunpack.c.l.bf16 %v472
    %v477 = vunpack.c.l.bf16 %v473
    %v478 = vunpack.c.l.bf16 %v474
    %v480 = vsel %vm242, %v404, 0
    %482 = vmatpush.msra.mxu0 0.0
    %483 = vmatpush.msra.mxu0 0.0
    %484 = vmatpush.msra.mxu0 0.0
    %485 = vmatpush.msra.mxu0 0.0
    %486 = vmatpush.msra.mxu0 0.0
    %487 = vmatpush.msra.mxu0 0.0
    %488 = vmatpush.msra.mxu0 0.0
    %489 = vmatpush.msra.mxu0 0.0
    %490 = vmatpush.msra.mxu0 0.0
    %491 = vmatpush.msra.mxu0 0.0
    %492 = vmatpush.msra.mxu0 0.0
    %493 = vmatpush.msra.mxu0 0.0
    %494 = vmatpush.msra.mxu0 %v478
    %495 = vmatpush.msra.mxu0 %v477
    %496 = vmatpush.msra.mxu0 %v476
    %497 = vmatpush.msra.mxu0 %v475
    %498 = vmatmul.f32.gmra.mxu0 %v480
    %v499 = vpop.f32.mrf.mxu0
    %v500 = vadd.f32 0.0, %v499
    %501 = vdwg.mxu0
    %v502 = vadd.f32 %v469, %v500
    %v503 = vld [vmem:[%s12] sm:$0x1]
    %v505 = vperm.slane %v503, 0
    %v507 = vadd.f32 %v502, %v505
    %v508 = vxor.u32 %v507, 2147483648
    %v509 = vmul.f32 %v508, 1.442695
    %v510 = vpow.pop %v509
    %v511 = vadd.f32 %v510, 1.0
    %v512 = vrcp.pop %v511
    %v513 = vmul.f32 %v511, %v512
    %v514 = vsub.f32 1.0, %v513
    %v515 = vmul.f32 %v512, %v514
    %v516 = vadd.f32 %v512, %v515
    %vm517 = vweird.f32 %v511
    %vm518 = vweird.f32 %v512
    %vm519 = vmor %vm517, %vm518
    %v520 = vsel %vm519, %v512, %v516
    %v521 = vand.u32 2147483647, %v511
    %vm522 = vcmp.eq.f32.partialorder %v521, 8.507059e+37
    %v523 = vand.u32 %v511, 2147483648
    %v524 = vor.u32 1.1754944e-38, %v523
    %v525 = vsel %vm522, %v524, %v520
    %v526 = vmul.f32 1.0, %v525
    %v527 = vtanh.pop %v507
    %529 = vrot.lane.b32.xlu0 %v405, 32
    %v530 = vpop.permute.xlu0 %529
    %v532 = vmul.f32 %v526, %v530
    %534 = vrot.lane.b32.xlu0 %v527, 64
    %v535 = vpop.permute.xlu0 %534
    %v537 = vmul.f32 %v526, %v535
    %539 = vrot.lane.b32.xlu0 %v537, 32
    %v540 = vpop.permute.xlu0 %539
    %v542 = vadd.f32 %v532, %v540
    %v543 = vtanh.pop %v542
    %545 = vrot.lane.b32.xlu0 %v543, 64
    %v546 = vpop.permute.xlu0 %545
    %v548 = vmul.f32 %v526, %v546
    %550 = vrot.lane.b32.xlu0 %v548, 32
    %v551 = vpop.permute.xlu0 %550
    %vm553 = vcmask 254976
    %554 = vst.msk [vmem:[%s17] sm:$0x3] %vm553, %v551
    %556 = vrot.lane.b32.xlu0 %v542, 96
    %v557 = vpop.permute.xlu0 %556
    %559 = vst.msk [vmem:[%s18] sm:$0x3] %vm553, %v557
    %v560 = vld [vmem:[%s228] sm:$0x3]
    %s561 = scalar_lea.vmem %s3, 2
    %v562 = vld [vmem:[%s561] sm:$0x3]
    %v563 = vld [vmem:[#allocation17] sm:$0xf]
    %v564 = vld [vmem:[#allocation17 + $0x4] sm:$0xf]
    %v565 = vld [vmem:[#allocation17 + $0x8] sm:$0xf]
    %v566 = vld [vmem:[#allocation17 + $0xc] sm:$0xf]
    %v567 = vunpack.c.l.bf16 %v563
    %v568 = vunpack.c.l.bf16 %v564
    %v569 = vunpack.c.l.bf16 %v565
    %v570 = vunpack.c.l.bf16 %v566
    %v571 = vld [vmem:[#allocation18] sm:$0xf]
    %v572 = vld [vmem:[#allocation18 + $0x4] sm:$0xf]
    %v573 = vld [vmem:[#allocation18 + $0x8] sm:$0xf]
    %v574 = vld [vmem:[#allocation18 + $0xc] sm:$0xf]
    %v575 = vunpack.c.l.bf16 %v571
    %v576 = vunpack.c.l.bf16 %v572
    %v577 = vunpack.c.l.bf16 %v573
    %v578 = vunpack.c.l.bf16 %v574
    %v580 = vsel %vm242, %v560, 0
    %582 = vmatpush.msra.mxu0 0.0
    %583 = vmatpush.msra.mxu0 0.0
    %584 = vmatpush.msra.mxu0 0.0
    %585 = vmatpush.msra.mxu0 0.0
    %586 = vmatpush.msra.mxu0 0.0
    %587 = vmatpush.msra.mxu0 0.0
    %588 = vmatpush.msra.mxu0 0.0
    %589 = vmatpush.msra.mxu0 0.0
    %590 = vmatpush.msra.mxu0 0.0
    %591 = vmatpush.msra.mxu0 0.0
    %592 = vmatpush.msra.mxu0 0.0
    %593 = vmatpush.msra.mxu0 0.0
    %594 = vmatpush.msra.mxu0 %v578
    %595 = vmatpush.msra.mxu0 %v577
    %596 = vmatpush.msra.mxu0 %v576
    %597 = vmatpush.msra.mxu0 %v575
    %598 = vmatmul.f32.gmra.mxu0 %v580
    %v599 = vpop.f32.mrf.mxu0
    %v600 = vadd.f32 0.0, %v599
    %601 = vdwg.mxu0
    %v602 = vsel %vm242, %v551, 0
    %604 = vmatpush.msra.mxu0 0.0
    %605 = vmatpush.msra.mxu0 0.0
    %606 = vmatpush.msra.mxu0 0.0
    %607 = vmatpush.msra.mxu0 0.0
    %608 = vmatpush.msra.mxu0 0.0
    %609 = vmatpush.msra.mxu0 0.0
    %610 = vmatpush.msra.mxu0 0.0
    %611 = vmatpush.msra.mxu0 0.0
    %612 = vmatpush.msra.mxu0 0.0
    %613 = vmatpush.msra.mxu0 0.0
    %614 = vmatpush.msra.mxu0 0.0
    %615 = vmatpush.msra.mxu0 0.0
    %616 = vmatpush.msra.mxu0 %v570
    %617 = vmatpush.msra.mxu0 %v569
    %618 = vmatpush.msra.mxu0 %v568
    %619 = vmatpush.msra.mxu0 %v567
    %620 = vmatmul.f32.gmra.mxu0 %v602
    %v621 = vpop.f32.mrf.mxu0
    %v622 = vadd.f32 %v600, %v621
    %623 = vdwg.mxu0
    %v624 = vld [vmem:[%s15] sm:$0x1]
    %v626 = vperm.slane %v624, 0
    %v628 = vadd.f32 %v622, %v626
    %v629 = vxor.u32 %v628, 2147483648
    %v630 = vmul.f32 %v629, 1.442695
    %v631 = vpow.pop %v630
    %v632 = vadd.f32 %v631, 1.0
    %v633 = vrcp.pop %v632
    %v634 = vmul.f32 %v632, %v633
    %v635 = vsub.f32 1.0, %v634
    %v636 = vmul.f32 %v633, %v635
    %v637 = vadd.f32 %v633, %v636
    %vm638 = vweird.f32 %v632
    %vm639 = vweird.f32 %v633
    %vm640 = vmor %vm638, %vm639
    %v641 = vsel %vm640, %v633, %v637
    %v642 = vand.u32 2147483647, %v632
    %vm643 = vcmp.eq.f32.partialorder %v642, 8.507059e+37
    %v644 = vand.u32 %v632, 2147483648
    %v645 = vor.u32 1.1754944e-38, %v644
    %v646 = vsel %vm643, %v645, %v641
    %v647 = vmul.f32 1.0, %v646
    %v648 = vtanh.pop %v628
    %650 = vrot.lane.b32.xlu0 %v562, 32
    %v651 = vpop.permute.xlu0 %650
    %v653 = vmul.f32 %v647, %v651
    %655 = vrot.lane.b32.xlu0 %v648, 64
    %v656 = vpop.permute.xlu0 %655
    %v658 = vmul.f32 %v647, %v656
    %660 = vrot.lane.b32.xlu0 %v658, 32
    %v661 = vpop.permute.xlu0 %660
    %v663 = vadd.f32 %v653, %v661
    %v664 = vtanh.pop %v663
    %666 = vrot.lane.b32.xlu0 %v664, 64
    %v667 = vpop.permute.xlu0 %666
    %v669 = vmul.f32 %v647, %v667
    %671 = vrot.lane.b32.xlu0 %v669, 32
    %v672 = vpop.permute.xlu0 %671
    %s674 = scalar_lea.vmem %s17, 2
    %675 = vst.msk [vmem:[%s674] sm:$0x3] %vm553, %v672
    %677 = vrot.lane.b32.xlu0 %v663, 96
    %v678 = vpop.permute.xlu0 %677
    %s680 = scalar_lea.vmem %s18, 2
    %681 = vst.msk [vmem:[%s680] sm:$0x3] %vm553, %v678
    %682 = vst.msk [vmem:[%s16] sm:$0x3] %vm553, %v672
    // Predicated region
    $region106: #{output_decoder_forward.2} parent=1 // pred_check
      _
    $region107: #{output_decoder_forward.2} parent=1 // pred_check_branch
      %684 = sbr.rel (0) target = $region109
    $region108: #{output_decoder_forward.2} parent=1 // pred_region
      _
    $region109: #{output_decoder_forward.2} parent=1 // pred_fallthru
      _
    // Predicated region
    $region110: #{output_decoder_forward.2} parent=1 // pred_check
      _
    $region111: #{output_decoder_forward.2} parent=1 // pred_check_branch
      %686 = sbr.rel (0) target = $region113
    $region112: #{output_decoder_forward.2} parent=1 // pred_region
      _
    $region113: #{output_decoder_forward.2} parent=1 // pred_fallthru
      _
    // Predicated region
    $region114: #{output_decoder_forward.2} parent=1 // pred_check
      _
    $region115: #{output_decoder_forward.2} parent=1 // pred_check_branch
      %688 = sbr.rel (0) target = $region117
    $region116: #{output_decoder_forward.2} parent=1 // pred_region
      _
    $region117: #{output_decoder_forward.2} parent=1 // pred_fallthru
      _
    // Predicated region
    $region118: #{output_decoder_forward.2} parent=1 // pred_check
      _
    $region119: #{output_decoder_forward.2} parent=1 // pred_check_branch
      %690 = sbr.rel (0) target = $region121
    $region120: #{output_decoder_forward.2} parent=1 // pred_region
      %692 = vsyncadd [#allocation6], 0
      %s694 = sshll.u32 [#allocation20], 4
      %s695 = int_to_ptr.vmem [resolvable:$true] %s694
      %s696 = sshll.u32 %s19, 4
      %s697 = int_to_ptr.hbm [resolvable:$true] %s696
      %699 = dma.vmem_to_hbm [thread:$0]  %s695, 32, %s697, [#allocation6]
    $region121: #{output_decoder_forward.2} parent=1 // pred_fallthru
      _
    // Predicated region
    $region122: #{output_decoder_forward.2} parent=1 // pred_check
      _
    $region123: #{output_decoder_forward.2} parent=1 // pred_check_branch
      %701 = sbr.rel (0) target = $region125
    $region124: #{output_decoder_forward.2} parent=1 // pred_region
      _
    $region125: #{output_decoder_forward.2} parent=1 // pred_fallthru
      _
    // Predicated region
    $region126: #{output_decoder_forward.2} parent=1 // pred_check
      _
    $region127: #{output_decoder_forward.2} parent=1 // pred_check_branch
      %703 = sbr.rel (0) target = $region129
    $region128: #{output_decoder_forward.2} parent=1 // pred_region
      _
    $region129: #{output_decoder_forward.2} parent=1 // pred_fallthru
      _
    // Predicated region
    $region130: #{output_decoder_forward.2} parent=1 // pred_check
      _
    $region131: #{output_decoder_forward.2} parent=1 // pred_check_branch
      %705 = sbr.rel (0) target = $region133
    $region132: #{output_decoder_forward.2} parent=1 // pred_region
      _
    $region133: #{output_decoder_forward.2} parent=1 // pred_fallthru
      _
    // Predicated region
    $region134: #{output_decoder_forward.2} parent=1 // pred_check
      _
    $region135: #{output_decoder_forward.2} parent=1 // pred_check_branch
      %707 = sbr.rel (0) target = $region137
    $region136: #{output_decoder_forward.2} parent=1 // pred_region
      %709 = dma.done [#allocation6], 32
    $region137: #{output_decoder_forward.2} parent=1 // pred_fallthru
      _
    %710 = vsyncpa [#allocation5], 1
    %711 = vsyncpa [#allocation10], 1
    %712 = vsyncpa [#allocation13], 1
    %713 = vsyncpa [#allocation16], 1
    %714 = vsyncpa [#allocation19], 1
    %715 = vsyncpa [#allocation6], 1
    %716 = vsyncpa [#allocation7], 1
  %717 = vsyncmov [#allocation3]
  %s718 = vpop.sfrf %717
  %p719 = scmp.eq.s32.totalorder %s718, 0
  %p720 = pneg %p719
  %722 = shalt.err (%p720)
  %s723 = scalar_lea.sflag [#allocation3], 1
  %724 = vsyncmov %s723
  %s725 = vpop.sfrf %724
  %p726 = scmp.eq.s32.totalorder %s725, 0
  %p727 = pneg %p726
  %729 = shalt.err (%p727)

</llo_original>
